<compile_context>
chip_gen: v6e
topology: v6e:2x2x1
jax: 0.10.0
libtpu: 0.0.40
codegen_flags: <defaults>
</compile_context>

<pallas_src>
import jax
import jax.numpy as jnp
from jax.experimental import pallas as pl
from jax.experimental.pallas import tpu as pltpu

_LANE = 128        # vreg lane width (last dim)
_ROW_ALIGN = 16    # bf16 packs 2 rows per sublane -> align batch tiles to 16

# Per-step VMEM budget used to auto-shrink tile_b (v7x has 64 MiB per TC;
# leave headroom for compiler-internal scratch / double buffers).
_VMEM_BUDGET = 48 << 20
_VMEM_FLOOR = 32 << 20
_VMEM_CEIL = 56 << 20


def _cdiv(a, b):
    return -(-a // b)


def _round_up(n, m):
    return _cdiv(n, m) * m


def _pad2d(a, rows, cols):
    r, c = a.shape
    if r == rows and c == cols:
        return a
    return jnp.pad(a, ((0, rows - r), (0, cols - c)))


def vae_encoder_kernel(x_ref, w1_ref, b1_ref, w2_ref, b2_ref, out_ref):
    # x:  (TILE_B, Dp) activation dtype   w1: (Dp, Hp) bf16   b1: (1, Hp) f32
    # w2: (Hp, Lp) bf16                   b2: (1, Lp) f32     out: (TILE_B, Lp)
    #
    # Cast x to the MXU compute dtype in-kernel (saves a full wrapper-side
    # pad+cast pass over x in HBM).
    x = x_ref[...].astype(w1_ref.dtype)
    # Layer 1: Linear (MXU, f32 accumulate) + bias broadcast + ReLU (VPU).
    h = jnp.dot(x, w1_ref[...], preferred_element_type=jnp.float32) + b1_ref[...]
    h = jnp.maximum(h, 0.0)
    # Layer 2: Linear (bf16 back into the MXU, f32 accumulate) + bias + Tanh.
    # Tanh kept in f32 (v5e has no bf16 EUP); not the binding unit here.
    z = jnp.dot(h.astype(w2_ref.dtype), w2_ref[...],
                preferred_element_type=jnp.float32) + b2_ref[...]
    out_ref[...] = jnp.tanh(z).astype(out_ref.dtype)


def _vmem_bytes(tile_b, dp, hp, lp, x_isz, out_isz, c_isz, weight_bufs):
    """Rough per-step VMEM footprint (bytes)."""
    weights = weight_bufs * ((dp * hp + hp * lp) * c_isz + (hp + lp) * 4)
    streams = 2 * tile_b * (dp * x_isz + lp * out_isz)          # double-buffered x/out
    interm = tile_b * (dp * c_isz + hp * (4 + c_isz) + lp * 4)  # bf16 x, f32+bf16 h, f32 z
    return weights + streams + interm


def vae_forward(x, w1, b1, w2, b2, *, target_tile_b=512,
                compute_dtype=jnp.bfloat16, out_dtype=None):
    """VAE encoder forward: tanh(relu(x @ w1 + b1) @ w2 + b2)."""
    B, D = x.shape
    H = w1.shape[1]
    L = w2.shape[1]
    out_dtype = x.dtype if out_dtype is None else out_dtype

    # Lane-dense padding of feature dims -> unmasked stores, full MXU tiles.
    Dp = _round_up(D, _LANE)
    Hp = _round_up(H, _LANE)
    Lp = _round_up(L, _LANE)

    x_isz = jnp.dtype(x.dtype).itemsize
    out_isz = jnp.dtype(out_dtype).itemsize
    c_isz = jnp.dtype(compute_dtype).itemsize

    # ---- batch tiling -------------------------------------------------------
    # Balanced, 16-row-aligned tiles; >= 2 tiles whenever possible so the
    # "parallel" batch axis can shard across both TensorCores on v7x.
    B16 = _round_up(B, _ROW_ALIGN)
    n_tiles = _cdiv(B16, target_tile_b)
    if B16 >= 2 * _ROW_ALIGN:
        n_tiles = max(n_tiles, 2)
    tile_b = _round_up(_cdiv(B16, n_tiles), _ROW_ALIGN)

    # Shrink tile_b until the per-step footprint fits the v7x 64 MiB/TC budget.
    while (tile_b > _ROW_ALIGN and
           _vmem_bytes(tile_b, Dp, Hp, Lp, x_isz, out_isz, c_isz, 1) > _VMEM_BUDGET):
        tile_b = max(_ROW_ALIGN, _round_up(tile_b // 2, _ROW_ALIGN))
    # TODO(synk): if the single-buffered weights alone exceed the VMEM budget,
    # K-tile w1 over Dp with a VMEM accumulator instead of keeping it resident.

    grid_b = _cdiv(B16, tile_b)   # no empty tiles
    Bp = grid_b * tile_b          # rows actually processed (>= B)

    # ---- operand prep -------------------------------------------------------
    # Weights/biases: one-time zero pad + bf16 cast (small, VMEM-resident).
    # Zero padding is exact: padded x columns hit zero w1 rows; padded hidden
    # columns get zero w1 cols / zero b1 -> relu(0)=0 and zero w2 rows keep
    # them out of the second matmul; padded latent columns are sliced off.
    w1_p = _pad2d(w1, Dp, Hp).astype(compute_dtype)
    b1_p = _pad2d(b1.reshape(1, H), 1, Hp).astype(jnp.float32)
    w2_p = _pad2d(w2, Hp, Lp).astype(compute_dtype)
    b2_p = _pad2d(b2.reshape(1, L), 1, Lp).astype(jnp.float32)

    # x: keep the caller's dtype (cast happens in-kernel) and only pad the
    # feature dim when it is not already lane-aligned.  The batch dim is never
    # padded: Pallas masks edge blocks and the extra rows are discarded.
    x_in = x if D == Dp else jnp.pad(x, ((0, 0), (0, Dp - D)))

    cost = pl.CostEstimate(
        flops=2 * Bp * (Dp * Hp + Hp * Lp),
        transcendentals=Bp * Lp,  # tanh
        bytes_accessed=(B * Dp * x_isz
                        + (Dp * Hp + Hp * Lp) * c_isz + (Hp + Lp) * 4
                        + B * Lp * out_isz),
    )

    def build_and_run(weight_bufs):
        if weight_bufs == 1:
            # Constant index_map -> VMEM-resident; single buffer (no point
            # double-buffering data that never changes).
            def w_spec(shape):
                return pl.BlockSpec(shape, lambda i: (0, 0),
                                    pipeline_mode=pl.Buffered(1))
        else:
            def w_spec(shape):
                return pl.BlockSpec(shape, lambda i: (0, 0))

        vmem_needed = _vmem_bytes(tile_b, Dp, Hp, Lp, x_isz, out_isz, c_isz,
                                  weight_bufs)
        vmem_limit = int(min(max(vmem_needed * 5 // 4 + (1 << 20), _VMEM_FLOOR),
                             _VMEM_CEIL))

        return pl.pallas_call(
            vae_encoder_kernel,
            out_shape=jax.ShapeDtypeStruct((B, Lp), out_dtype),
            grid_spec=pltpu.PrefetchScalarGridSpec(
                num_scalar_prefetch=0,
                grid=(grid_b,),
                in_specs=[
                    # x streams with the batch grid axis (auto double-buffered).
                    pl.BlockSpec((tile_b, Dp), lambda i: (i, 0)),
                    w_spec((Dp, Hp)),
                    w_spec((1, Hp)),
                    w_spec((Hp, Lp)),
                    w_spec((1, Lp)),
                ],
                out_specs=pl.BlockSpec((tile_b, Lp), lambda i: (i, 0)),
            ),
            # Batch steps are independent -> shard across both TCs on v7x.
            compiler_params=pltpu.CompilerParams(
                dimension_semantics=("parallel",),
                vmem_limit_bytes=vmem_limit,
            ),
            cost_estimate=cost,
        )(x_in, w1_p, b1_p, w2_p, b2_p)

    try:
        out_p = build_and_run(weight_bufs=1)
    except Exception:
        # Fallback for JAX/Mosaic versions that reject single-buffered specs.
        out_p = build_and_run(weight_bufs=2)

    # Strip latent-dim padding (cheap XLA slice outside the kernel).
    return out_p if Lp == L else out_p[:, :L]


def init_params(key, input_dim, hidden_dim, latent_dim, dtype=jnp.float32):
    """Deterministic init mimicking PyTorch nn.Linear (uniform +/- 1/sqrt(fan_in)).

    Weights are stored transposed vs. PyTorch (in_features, out_features) so
    the kernel computes x @ W + b directly on the MXU.
    """
    k1, k2, k3, k4 = jax.random.split(key, 4)
    bound1 = 1.0 / jnp.sqrt(input_dim)
    bound2 = 1.0 / jnp.sqrt(hidden_dim)
    w1 = jax.random.uniform(k1, (input_dim, hidden_dim), dtype, -bound1, bound1)
    b1 = jax.random.uniform(k2, (1, hidden_dim), dtype, -bound1, bound1)
    w2 = jax.random.uniform(k3, (hidden_dim, latent_dim), dtype, -bound2, bound2)
    b2 = jax.random.uniform(k4, (1, latent_dim), dtype, -bound2, bound2)
    return w1, b1, w2, b2


if __name__ == "__main__":
    batch = 8
    input_dim = 32
    hidden_dim = 64
    latent_dim = 16

    key = jax.random.PRNGKey(0)
    kx, kp = jax.random.split(key)
    x = jax.random.normal(kx, (batch, input_dim), jnp.float32)
    w1, b1, w2, b2 = init_params(kp, input_dim, hidden_dim, latent_dim)

    out = vae_forward(x, w1, b1, w2, b2)
    out = jax.block_until_ready(out)

    # Pure-JAX f32 reference. Kernel uses bf16 matmul operands (f32 accumulate)
    # and a bounded tanh output, so a few e-2 absolute tolerance is sufficient.
    ref = jnp.tanh(jnp.maximum(x @ w1 + b1, 0.0) @ w2 + b2)
    assert out.shape == (batch, latent_dim)
    assert out.dtype == x.dtype
    assert jnp.allclose(out, ref, atol=3e-2, rtol=3e-2), (
        float(jnp.max(jnp.abs(out - ref))))

    print("KERNEL_OK")
</pallas_src>

<mosaic_0001>
module attributes {stable_mosaic.version = 11 : i64} {
  func.func @vae_encoder_kernel(%arg0: i32, %arg1: memref<16x128xf32, #tpu.memory_space<vmem>>, %arg2: memref<128x128xbf16, #tpu.memory_space<vmem>>, %arg3: memref<1x128xf32, #tpu.memory_space<vmem>>, %arg4: memref<128x128xbf16, #tpu.memory_space<vmem>>, %arg5: memref<1x128xf32, #tpu.memory_space<vmem>>, %arg6: memref<16x128xf32, #tpu.memory_space<vmem>>) attributes {dimension_semantics = [#tpu.dimension_semantics<parallel>], iteration_bounds = array<i64: 1>, scalar_prefetch = 0 : i64, scratch_operands = 0 : i64, tpu.core_type = #tpu.core_type<tc>, window_params = [{transform_indices = @transform_0, window_bounds = array<i64: 16, 128>}, {pipeline_mode = #tpu.pipeline_mode<synchronous>, transform_indices = @transform_1, window_bounds = array<i64: 128, 128>}, {pipeline_mode = #tpu.pipeline_mode<synchronous>, transform_indices = @transform_2, window_bounds = array<i64: 1, 128>}, {pipeline_mode = #tpu.pipeline_mode<synchronous>, transform_indices = @transform_3, window_bounds = array<i64: 128, 128>}, {pipeline_mode = #tpu.pipeline_mode<synchronous>, transform_indices = @transform_4, window_bounds = array<i64: 1, 128>}, {transform_indices = @transform_5, window_bounds = array<i64: 16, 128>}]} {
    %c0 = arith.constant 0 : index
    %c0_0 = arith.constant 0 : index
    %0 = vector.load %arg1[%c0, %c0_0] : memref<16x128xf32, #tpu.memory_space<vmem>>, vector<16x128xf32>
    %1 = arith.truncf %0 : vector<16x128xf32> to vector<16x128xbf16>
    %c0_1 = arith.constant 0 : index
    %c0_2 = arith.constant 0 : index
    %2 = vector.load %arg2[%c0_1, %c0_2] : memref<128x128xbf16, #tpu.memory_space<vmem>>, vector<128x128xbf16>
    %cst = arith.constant dense<0.000000e+00> : vector<16x128xf32>
    %3 = tpu.matmul %1, %2, %cst {dimension_numbers = #tpu.dot_dimension_numbers<[1], [0], [0], [1], [0, 0, 1, 1], [], []>} : vector<16x128xbf16>, vector<128x128xbf16>, vector<16x128xf32> -> vector<16x128xf32>
    %c0_3 = arith.constant 0 : index
    %c0_4 = arith.constant 0 : index
    %4 = vector.load %arg3[%c0_3, %c0_4] : memref<1x128xf32, #tpu.memory_space<vmem>>, vector<1x128xf32>
    %5 = vector.broadcast %4 : vector<1x128xf32> to vector<16x128xf32>
    %6 = arith.addf %3, %5 : vector<16x128xf32>
    %cst_5 = arith.constant 0.000000e+00 : f32
    %7 = vector.broadcast %cst_5 : f32 to vector<16x128xf32>
    %8 = arith.maximumf %6, %7 : vector<16x128xf32>
    %9 = arith.truncf %8 : vector<16x128xf32> to vector<16x128xbf16>
    %c0_6 = arith.constant 0 : index
    %c0_7 = arith.constant 0 : index
    %10 = vector.load %arg4[%c0_6, %c0_7] : memref<128x128xbf16, #tpu.memory_space<vmem>>, vector<128x128xbf16>
    %cst_8 = arith.constant dense<0.000000e+00> : vector<16x128xf32>
    %11 = tpu.matmul %9, %10, %cst_8 {dimension_numbers = #tpu.dot_dimension_numbers<[1], [0], [0], [1], [0, 0, 1, 1], [], []>} : vector<16x128xbf16>, vector<128x128xbf16>, vector<16x128xf32> -> vector<16x128xf32>
    %c0_9 = arith.constant 0 : index
    %c0_10 = arith.constant 0 : index
    %12 = vector.load %arg5[%c0_9, %c0_10] : memref<1x128xf32, #tpu.memory_space<vmem>>, vector<1x128xf32>
    %13 = vector.broadcast %12 : vector<1x128xf32> to vector<16x128xf32>
    %14 = arith.addf %11, %13 : vector<16x128xf32>
    %15 = math.tanh %14 : vector<16x128xf32>
    %c0_11 = arith.constant 0 : index
    %c0_12 = arith.constant 0 : index
    %16 = vector.load %arg6[%c0_11, %c0_12] : memref<16x128xf32, #tpu.memory_space<vmem>>, vector<16x128xf32>
    tpu.vector_store %arg6[%c0_11, %c0_12], %15 {strides = array<i32>} : memref<16x128xf32, #tpu.memory_space<vmem>>, vector<16x128xf32>,
    return
  }
  func.func @transform_0(%arg0: i32) -> (i32, i32) {
    %c0_i32 = arith.constant 0 : i32
    %c0_i32_0 = arith.constant 0 : i32
    return %arg0, %c0_i32 : i32, i32
  }
  func.func @transform_1(%arg0: i32) -> (i32, i32) {
    %c0_i32 = arith.constant 0 : i32
    %c0_i32_0 = arith.constant 0 : i32
    %c0_i32_1 = arith.constant 0 : i32
    return %c0_i32, %c0_i32_0 : i32, i32
  }
  func.func @transform_2(%arg0: i32) -> (i32, i32) {
    %c0_i32 = arith.constant 0 : i32
    %c0_i32_0 = arith.constant 0 : i32
    %c0_i32_1 = arith.constant 0 : i32
    return %c0_i32, %c0_i32_0 : i32, i32
  }
  func.func @transform_3(%arg0: i32) -> (i32, i32) {
    %c0_i32 = arith.constant 0 : i32
    %c0_i32_0 = arith.constant 0 : i32
    %c0_i32_1 = arith.constant 0 : i32
    return %c0_i32, %c0_i32_0 : i32, i32
  }
  func.func @transform_4(%arg0: i32) -> (i32, i32) {
    %c0_i32 = arith.constant 0 : i32
    %c0_i32_0 = arith.constant 0 : i32
    %c0_i32_1 = arith.constant 0 : i32
    return %c0_i32, %c0_i32_0 : i32, i32
  }
  func.func @transform_5(%arg0: i32) -> (i32, i32) {
    %c0_i32 = arith.constant 0 : i32
    %c0_i32_0 = arith.constant 0 : i32
    return %arg0, %c0_i32 : i32, i32
  }
}

module attributes {stable_mosaic.version = 11 : i64} {
  func.func @vae_encoder_kernel(%arg0: i32, %arg1: memref<16x128xf32, #tpu.memory_space<vmem>>, %arg2: memref<128x128xbf16, #tpu.memory_space<vmem>>, %arg3: memref<1x128xf32, #tpu.memory_space<vmem>>, %arg4: memref<128x128xbf16, #tpu.memory_space<vmem>>, %arg5: memref<1x128xf32, #tpu.memory_space<vmem>>, %arg6: memref<16x128xf32, #tpu.memory_space<vmem>>) attributes {dimension_semantics = [#tpu.dimension_semantics<parallel>], iteration_bounds = array<i64: 1>, scalar_prefetch = 0 : i64, scratch_operands = 0 : i64, tpu.core_type = #tpu.core_type<tc>, window_params = [{transform_indices = @transform_0, window_bounds = array<i64: 16, 128>}, {pipeline_mode = #tpu.pipeline_mode<synchronous>, transform_indices = @transform_1, window_bounds = array<i64: 128, 128>}, {pipeline_mode = #tpu.pipeline_mode<synchronous>, transform_indices = @transform_2, window_bounds = array<i64: 1, 128>}, {pipeline_mode = #tpu.pipeline_mode<synchronous>, transform_indices = @transform_3, window_bounds = array<i64: 128, 128>}, {pipeline_mode = #tpu.pipeline_mode<synchronous>, transform_indices = @transform_4, window_bounds = array<i64: 1, 128>}, {transform_indices = @transform_5, window_bounds = array<i64: 16, 128>}]} {
    %c0 = arith.constant 0 : index
    %c0_0 = arith.constant 0 : index
    %0 = vector.load %arg1[%c0, %c0_0] : memref<16x128xf32, #tpu.memory_space<vmem>>, vector<16x128xf32>
    %1 = arith.truncf %0 : vector<16x128xf32> to vector<16x128xbf16>
    %c0_1 = arith.constant 0 : index
    %c0_2 = arith.constant 0 : index
    %2 = vector.load %arg2[%c0_1, %c0_2] : memref<128x128xbf16, #tpu.memory_space<vmem>>, vector<128x128xbf16>
    %cst = arith.constant dense<0.000000e+00> : vector<16x128xf32>
    %3 = tpu.matmul %1, %2, %cst {dimension_numbers = #tpu.dot_dimension_numbers<[1], [0], [0], [1], [0, 0, 1, 1], [], []>} : vector<16x128xbf16>, vector<128x128xbf16>, vector<16x128xf32> -> vector<16x128xf32>
    %c0_3 = arith.constant 0 : index
    %c0_4 = arith.constant 0 : index
    %4 = vector.load %arg3[%c0_3, %c0_4] : memref<1x128xf32, #tpu.memory_space<vmem>>, vector<1x128xf32>
    %5 = vector.broadcast %4 : vector<1x128xf32> to vector<16x128xf32>
    %6 = arith.addf %3, %5 : vector<16x128xf32>
    %cst_5 = arith.constant 0.000000e+00 : f32
    %7 = vector.broadcast %cst_5 : f32 to vector<16x128xf32>
    %8 = arith.maximumf %6, %7 : vector<16x128xf32>
    %9 = arith.truncf %8 : vector<16x128xf32> to vector<16x128xbf16>
    %c0_6 = arith.constant 0 : index
    %c0_7 = arith.constant 0 : index
    %10 = vector.load %arg4[%c0_6, %c0_7] : memref<128x128xbf16, #tpu.memory_space<vmem>>, vector<128x128xbf16>
    %cst_8 = arith.constant dense<0.000000e+00> : vector<16x128xf32>
    %11 = tpu.matmul %9, %10, %cst_8 {dimension_numbers = #tpu.dot_dimension_numbers<[1], [0], [0], [1], [0, 0, 1, 1], [], []>} : vector<16x128xbf16>, vector<128x128xbf16>, vector<16x128xf32> -> vector<16x128xf32>
    %c0_9 = arith.constant 0 : index
    %c0_10 = arith.constant 0 : index
    %12 = vector.load %arg5[%c0_9, %c0_10] : memref<1x128xf32, #tpu.memory_space<vmem>>, vector<1x128xf32>
    %13 = vector.broadcast %12 : vector<1x128xf32> to vector<16x128xf32>
    %14 = arith.addf %11, %13 : vector<16x128xf32>
    %15 = math.tanh %14 : vector<16x128xf32>
    %c0_11 = arith.constant 0 : index
    %c0_12 = arith.constant 0 : index
    %16 = vector.load %arg6[%c0_11, %c0_12] : memref<16x128xf32, #tpu.memory_space<vmem>>, vector<16x128xf32>
    tpu.vector_store %arg6[%c0_11, %c0_12], %15 {strides = array<i32>} : memref<16x128xf32, #tpu.memory_space<vmem>>, vector<16x128xf32>,
    return
  }
  func.func @transform_0(%arg0: i32) -> (i32, i32) {
    %c0_i32 = arith.constant 0 : i32
    %c0_i32_0 = arith.constant 0 : i32
    return %arg0, %c0_i32 : i32, i32
  }
  func.func @transform_1(%arg0: i32) -> (i32, i32) {
    %c0_i32 = arith.constant 0 : i32
    %c0_i32_0 = arith.constant 0 : i32
    %c0_i32_1 = arith.constant 0 : i32
    return %c0_i32, %c0_i32_0 : i32, i32
  }
  func.func @transform_2(%arg0: i32) -> (i32, i32) {
    %c0_i32 = arith.constant 0 : i32
    %c0_i32_0 = arith.constant 0 : i32
    %c0_i32_1 = arith.constant 0 : i32
    return %c0_i32, %c0_i32_0 : i32, i32
  }
  func.func @transform_3(%arg0: i32) -> (i32, i32) {
    %c0_i32 = arith.constant 0 : i32
    %c0_i32_0 = arith.constant 0 : i32
    %c0_i32_1 = arith.constant 0 : i32
    return %c0_i32, %c0_i32_0 : i32, i32
  }
  func.func @transform_4(%arg0: i32) -> (i32, i32) {
    %c0_i32 = arith.constant 0 : i32
    %c0_i32_0 = arith.constant 0 : i32
    %c0_i32_1 = arith.constant 0 : i32
    return %c0_i32, %c0_i32_0 : i32, i32
  }
  func.func @transform_5(%arg0: i32) -> (i32, i32) {
    %c0_i32 = arith.constant 0 : i32
    %c0_i32_0 = arith.constant 0 : i32
    return %arg0, %c0_i32 : i32, i32
  }
}

</mosaic_0001>

<llo_original>
// kernel: tpu_custom_call.1
$region0: #{tpu_custom_call.1}
  #allocation0 [shape = 'u32[]', space=smem, size = 0x4, offset = 0x4, fixed_abs, tag = 'smem constant byte address 0x4 - core index']
  #allocation1 [shape = 'u32[144,128]{1,0:T(1,128)}', space=vmem, size = 0x12000, scoped, tag = 'internal scratch']
  %s0 = inlined_call_operand.hbm [shape: f32[8,128], index: 0, kind: input, shape index: {}]
  %s1 = inlined_call_operand.hbm [shape: bf16[128,128], index: 1, kind: input, shape index: {}]
  %s2 = inlined_call_operand.vmem [shape: f32[1,128], index: 2, kind: input, shape index: {}]
  %s3 = inlined_call_operand.hbm [shape: bf16[128,128], index: 3, kind: input, shape index: {}]
  %s4 = inlined_call_operand.vmem [shape: f32[1,128], index: 4, kind: input, shape index: {}]
  %s5 = inlined_call_operand.hbm [shape: f32[8,128], index: 5, kind: output, shape index: {}]
  %s6 = sld [smem:[#allocation0]]
  $region42: #{tpu_custom_call.1} parent=0
    _
  %s8 = ssub.s32 1, %s6
  %s9 = scalar_select 0, %s8, %s6
  $region1: #{tpu_custom_call.1} parent=0
    #allocation2 [shape = 'u8[8192]{0}', space=vmem, size = 0x2000, scoped, tag = 'input window, operand 0, single buffered']
    #allocation3 [shape = 's32[1]{0}', space=sflag, size = 0x4, scoped, tag = 'scoped memory for tpu_custom_call.1']
    #allocation4 [shape = 's32[1]{0}', space=sflag, size = 0x4, scoped, tag = 'scoped memory for tpu_custom_call.1']
    #allocation5 [shape = 'u8[32768]{0}', space=vmem, size = 0x8000, scoped, tag = 'input window, operand 1, single buffered']
    #allocation6 [shape = 's32[1]{0}', space=sflag, size = 0x4, scoped, tag = 'scoped memory for tpu_custom_call.1']
    #allocation7 [shape = 'u8[32768]{0}', space=vmem, size = 0x8000, scoped, tag = 'input window, operand 3, single buffered']
    #allocation8 [shape = 'u8[8192]{0}', space=vmem, size = 0x2000, scoped, tag = 'output window, operand 0, single buffered']
    %10 = vsyncpa [#allocation3], 0
    %11 = vsyncpa [#allocation6], 0
    %12 = vsyncpa [#allocation4], 0
    // Predicated region
    $region2: #{tpu_custom_call.1} parent=1 // pred_check
      _
    $region3: #{tpu_custom_call.1} parent=1 // pred_check_branch
      %14 = sbr.rel (0) target = $region5
    $region4: #{tpu_custom_call.1} parent=1 // pred_region
      %s16 = ssub.s32 256, 128
      %17 = vsyncadd [#allocation3], %s16
      %s18 = sshll.u32 [#allocation2], 4
      %s19 = int_to_ptr.vmem [resolvable:$true] %s18
      %24 = dma.hbm_to_vmem [thread:$0]  %s0, 128, %s19, [#allocation3], 128, 128, 8
    $region5: #{tpu_custom_call.1} parent=1 // pred_fallthru
      _
    // Predicated region
    $region6: #{tpu_custom_call.1} parent=1 // pred_check
      _
    $region7: #{tpu_custom_call.1} parent=1 // pred_check_branch
      %26 = sbr.rel (0) target = $region9
    $region8: #{tpu_custom_call.1} parent=1 // pred_region
      %s28 = ssub.s32 1024, 1024
      %29 = vsyncadd [#allocation6], %s28
      %s30 = sshll.u32 [#allocation5], 4
      %s31 = int_to_ptr.vmem [resolvable:$true] %s30
      %36 = dma.hbm_to_vmem [thread:$0]  %s1, 1024, %s31, [#allocation6], 64, 64, 4
    $region9: #{tpu_custom_call.1} parent=1 // pred_fallthru
      _
    // Predicated region
    $region10: #{tpu_custom_call.1} parent=1 // pred_check
      _
    $region11: #{tpu_custom_call.1} parent=1 // pred_check_branch
      %38 = sbr.rel (0) target = $region13
    $region12: #{tpu_custom_call.1} parent=1 // pred_region
      _
    $region13: #{tpu_custom_call.1} parent=1 // pred_fallthru
      _
    // Predicated region
    $region14: #{tpu_custom_call.1} parent=1 // pred_check
      _
    $region15: #{tpu_custom_call.1} parent=1 // pred_check_branch
      %40 = sbr.rel (0) target = $region17
    $region16: #{tpu_custom_call.1} parent=1 // pred_region
      %s42 = ssub.s32 1024, 1024
      %43 = vsyncadd [#allocation6], %s42
      %s44 = sshll.u32 [#allocation7], 4
      %s45 = int_to_ptr.vmem [resolvable:$true] %s44
      %50 = dma.hbm_to_vmem [thread:$0]  %s3, 1024, %s45, [#allocation6], 64, 64, 4
    $region17: #{tpu_custom_call.1} parent=1 // pred_fallthru
      _
    // Predicated region
    $region18: #{tpu_custom_call.1} parent=1 // pred_check
      _
    $region19: #{tpu_custom_call.1} parent=1 // pred_check_branch
      %52 = sbr.rel (0) target = $region21
    $region20: #{tpu_custom_call.1} parent=1 // pred_region
      _
    $region21: #{tpu_custom_call.1} parent=1 // pred_fallthru
      _
    // Predicated region
    $region22: #{tpu_custom_call.1} parent=1 // pred_check
      _
    $region23: #{tpu_custom_call.1} parent=1 // pred_check_branch
      %54 = sbr.rel (0) target = $region25
    $region24: #{tpu_custom_call.1} parent=1 // pred_region
      %55 = dma.done [#allocation3], 256
    $region25: #{tpu_custom_call.1} parent=1 // pred_fallthru
      _
    // Predicated region
    $region26: #{tpu_custom_call.1} parent=1 // pred_check
      _
    $region27: #{tpu_custom_call.1} parent=1 // pred_check_branch
      %57 = sbr.rel (0) target = $region29
    $region28: #{tpu_custom_call.1} parent=1 // pred_region
      %58 = dma.done [#allocation6], 1024
    $region29: #{tpu_custom_call.1} parent=1 // pred_fallthru
      _
    // Predicated region
    $region30: #{tpu_custom_call.1} parent=1 // pred_check
      _
    $region31: #{tpu_custom_call.1} parent=1 // pred_check_branch
      %60 = sbr.rel (0) target = $region33
    $region32: #{tpu_custom_call.1} parent=1 // pred_region
      %61 = dma.done [#allocation6], 1024
    $region33: #{tpu_custom_call.1} parent=1 // pred_fallthru
      _
    %v63 = vld [vmem:[#allocation2] sm:$0xff]
    %v64 = vld [vmem:[#allocation2 + $0x8] sm:$0xff]
    %v65 = vpack.c.bf16 %v64, %v63
    %v66 = vld [vmem:[#allocation5] sm:$0xf]
    %v67 = vld [vmem:[#allocation5 + $0x4] sm:$0xf]
    %v68 = vld [vmem:[#allocation5 + $0x8] sm:$0xf]
    %v69 = vld [vmem:[#allocation5 + $0xc] sm:$0xf]
    %v70 = vld [vmem:[#allocation5 + $0x10] sm:$0xf]
    %v71 = vld [vmem:[#allocation5 + $0x14] sm:$0xf]
    %v72 = vld [vmem:[#allocation5 + $0x18] sm:$0xf]
    %v73 = vld [vmem:[#allocation5 + $0x1c] sm:$0xf]
    %v74 = vld [vmem:[#allocation5 + $0x20] sm:$0xf]
    %v75 = vld [vmem:[#allocation5 + $0x24] sm:$0xf]
    %v76 = vld [vmem:[#allocation5 + $0x28] sm:$0xf]
    %v77 = vld [vmem:[#allocation5 + $0x2c] sm:$0xf]
    %v78 = vld [vmem:[#allocation5 + $0x30] sm:$0xf]
    %v79 = vld [vmem:[#allocation5 + $0x34] sm:$0xf]
    %v80 = vld [vmem:[#allocation5 + $0x38] sm:$0xf]
    %v81 = vld [vmem:[#allocation5 + $0x3c] sm:$0xf]
    %v82 = vld [vmem:[%s2] sm:$0x1]
    %v84 = vlaneseq
    %v85 = vshrl.u32 %v84, 7
    %v86 = vsub.s32 0, %v85
    %v87 = vrot.slane %v82, %v86
    %v105 = vunpack.c.l.b16 %v66
    %v106 = vunpack.c.l.b16 %v67
    %v107 = vunpack.c.l.b16 %v68
    %v108 = vunpack.c.l.b16 %v69
    %v109 = vunpack.c.l.b16 %v70
    %v110 = vunpack.c.l.b16 %v71
    %v111 = vunpack.c.l.b16 %v72
    %v112 = vunpack.c.l.b16 %v73
    %v113 = vunpack.c.l.b16 %v74
    %v114 = vunpack.c.l.b16 %v75
    %v115 = vunpack.c.l.b16 %v76
    %v116 = vunpack.c.l.b16 %v77
    %v117 = vunpack.c.l.b16 %v78
    %v118 = vunpack.c.l.b16 %v79
    %v119 = vunpack.c.l.b16 %v80
    %v120 = vunpack.c.l.b16 %v81
    %v121 = vpack.c.b16 %v106, %v105
    %v122 = vpack.c.b16 %v108, %v107
    %v123 = vpack.c.b16 %v110, %v109
    %v124 = vpack.c.b16 %v112, %v111
    %v125 = vpack.c.b16 %v114, %v113
    %v126 = vpack.c.b16 %v116, %v115
    %v127 = vpack.c.b16 %v118, %v117
    %v128 = vpack.c.b16 %v120, %v119
    %137 = vmatprep.subr.bf16.mxu0 0
    %138 = vmatpush1.bf16.msra.mxu0 %v128
    %139 = vmatprep.subr.bf16.mxu0 0
    %140 = vmatpush1.bf16.msra.mxu0 %v127
    %141 = vmatprep.subr.bf16.mxu0 0
    %142 = vmatpush1.bf16.msra.mxu0 %v126
    %143 = vmatprep.subr.bf16.mxu0 0
    %144 = vmatpush1.bf16.msra.mxu0 %v125
    %145 = vmatprep.subr.bf16.mxu0 0
    %146 = vmatpush1.bf16.msra.mxu0 %v124
    %147 = vmatprep.subr.bf16.mxu0 0
    %148 = vmatpush1.bf16.msra.mxu0 %v123
    %149 = vmatprep.subr.bf16.mxu0 0
    %150 = vmatpush1.bf16.msra.mxu0 %v122
    %151 = vmatprep.subr.bf16.mxu0 0
    %152 = vmatpush1.bf16.msra.mxu0 %v121
    %153 = vmatprep.subr.bf16.mxu0 0
    %154 = vmatpush2.bf16.msra.mxu0 0
    %155 = vmatprep.subr.bf16.mxu0 0
    %156 = vmatpush2.bf16.msra.mxu0 0
    %157 = vmatprep.subr.bf16.mxu0 0
    %158 = vmatpush2.bf16.msra.mxu0 0
    %159 = vmatprep.subr.bf16.mxu0 0
    %160 = vmatpush2.bf16.msra.mxu0 0
    %161 = vmatprep.subr.bf16.mxu0 0
    %162 = vmatpush2.bf16.msra.mxu0 0
    %163 = vmatprep.subr.bf16.mxu0 0
    %164 = vmatpush2.bf16.msra.mxu0 0
    %165 = vmatprep.subr.bf16.mxu0 0
    %166 = vmatpush2.bf16.msra.mxu0 0
    %167 = vmatprep.subr.bf16.mxu0 0
    %168 = vmatpush2.bf16.msra.mxu0 0
    %169 = vmatprep.mubr.bf16.mxu0 0
    %170 = vmatmul.mubr.bf16.gmra.mxu0 %v65
    %v171 = vpop.f32.mrf.mxu0
    %v172 = vadd.f32 %v87, %v171
    %v173 = vpop.f32.mrf.mxu0
    %v174 = vpop.f32.mrf.mxu0
    %v175 = vadd.f32 %v87, %v174
    %v176 = vpop.f32.mrf.mxu0
    %177 = vdwg.mxu0
    %v178 = vmax.f32 %v172, 0.0
    %v179 = vmax.f32 %v175, 0.0
    %v180 = vpack.c.bf16 %v179, %v178
    %v181 = vld [vmem:[#allocation7] sm:$0xf]
    %v182 = vld [vmem:[#allocation7 + $0x4] sm:$0xf]
    %v183 = vld [vmem:[#allocation7 + $0x8] sm:$0xf]
    %v184 = vld [vmem:[#allocation7 + $0xc] sm:$0xf]
    %v185 = vld [vmem:[#allocation7 + $0x10] sm:$0xf]
    %v186 = vld [vmem:[#allocation7 + $0x14] sm:$0xf]
    %v187 = vld [vmem:[#allocation7 + $0x18] sm:$0xf]
    %v188 = vld [vmem:[#allocation7 + $0x1c] sm:$0xf]
    %v189 = vld [vmem:[#allocation7 + $0x20] sm:$0xf]
    %v190 = vld [vmem:[#allocation7 + $0x24] sm:$0xf]
    %v191 = vld [vmem:[#allocation7 + $0x28] sm:$0xf]
    %v192 = vld [vmem:[#allocation7 + $0x2c] sm:$0xf]
    %v193 = vld [vmem:[#allocation7 + $0x30] sm:$0xf]
    %v194 = vld [vmem:[#allocation7 + $0x34] sm:$0xf]
    %v195 = vld [vmem:[#allocation7 + $0x38] sm:$0xf]
    %v196 = vld [vmem:[#allocation7 + $0x3c] sm:$0xf]
    %v197 = vld [vmem:[%s4] sm:$0x1]
    %v199 = vlaneseq
    %v200 = vshrl.u32 %v199, 7
    %v201 = vsub.s32 0, %v200
    %v202 = vrot.slane %v197, %v201
    %v220 = vunpack.c.l.b16 %v181
    %v221 = vunpack.c.l.b16 %v182
    %v222 = vunpack.c.l.b16 %v183
    %v223 = vunpack.c.l.b16 %v184
    %v224 = vunpack.c.l.b16 %v185
    %v225 = vunpack.c.l.b16 %v186
    %v226 = vunpack.c.l.b16 %v187
    %v227 = vunpack.c.l.b16 %v188
    %v228 = vunpack.c.l.b16 %v189
    %v229 = vunpack.c.l.b16 %v190
    %v230 = vunpack.c.l.b16 %v191
    %v231 = vunpack.c.l.b16 %v192
    %v232 = vunpack.c.l.b16 %v193
    %v233 = vunpack.c.l.b16 %v194
    %v234 = vunpack.c.l.b16 %v195
    %v235 = vunpack.c.l.b16 %v196
    %v236 = vpack.c.b16 %v221, %v220
    %v237 = vpack.c.b16 %v223, %v222
    %v238 = vpack.c.b16 %v225, %v224
    %v239 = vpack.c.b16 %v227, %v226
    %v240 = vpack.c.b16 %v229, %v228
    %v241 = vpack.c.b16 %v231, %v230
    %v242 = vpack.c.b16 %v233, %v232
    %v243 = vpack.c.b16 %v235, %v234
    %252 = vmatprep.subr.bf16.mxu0 0
    %253 = vmatpush1.bf16.msra.mxu0 %v243
    %254 = vmatprep.subr.bf16.mxu0 0
    %255 = vmatpush1.bf16.msra.mxu0 %v242
    %256 = vmatprep.subr.bf16.mxu0 0
    %257 = vmatpush1.bf16.msra.mxu0 %v241
    %258 = vmatprep.subr.bf16.mxu0 0
    %259 = vmatpush1.bf16.msra.mxu0 %v240
    %260 = vmatprep.subr.bf16.mxu0 0
    %261 = vmatpush1.bf16.msra.mxu0 %v239
    %262 = vmatprep.subr.bf16.mxu0 0
    %263 = vmatpush1.bf16.msra.mxu0 %v238
    %264 = vmatprep.subr.bf16.mxu0 0
    %265 = vmatpush1.bf16.msra.mxu0 %v237
    %266 = vmatprep.subr.bf16.mxu0 0
    %267 = vmatpush1.bf16.msra.mxu0 %v236
    %268 = vmatprep.subr.bf16.mxu0 0
    %269 = vmatpush2.bf16.msra.mxu0 0
    %270 = vmatprep.subr.bf16.mxu0 0
    %271 = vmatpush2.bf16.msra.mxu0 0
    %272 = vmatprep.subr.bf16.mxu0 0
    %273 = vmatpush2.bf16.msra.mxu0 0
    %274 = vmatprep.subr.bf16.mxu0 0
    %275 = vmatpush2.bf16.msra.mxu0 0
    %276 = vmatprep.subr.bf16.mxu0 0
    %277 = vmatpush2.bf16.msra.mxu0 0
    %278 = vmatprep.subr.bf16.mxu0 0
    %279 = vmatpush2.bf16.msra.mxu0 0
    %280 = vmatprep.subr.bf16.mxu0 0
    %281 = vmatpush2.bf16.msra.mxu0 0
    %282 = vmatprep.subr.bf16.mxu0 0
    %283 = vmatpush2.bf16.msra.mxu0 0
    %284 = vmatprep.mubr.bf16.mxu0 0
    %285 = vmatmul.mubr.bf16.gmra.mxu0 %v180
    %v286 = vpop.f32.mrf.mxu0
    %v287 = vadd.f32 %v202, %v286
    %v288 = vpop.f32.mrf.mxu0
    %v289 = vpop.f32.mrf.mxu0
    %v290 = vadd.f32 %v202, %v289
    %v291 = vpop.f32.mrf.mxu0
    %292 = vdwg.mxu0
    %v293 = vtanh.pop %v287
    %v294 = vtanh.pop %v290
    %295 = vst [vmem:[#allocation8] sm:$0xff] %v293
    %296 = vst [vmem:[#allocation8 + $0x8] sm:$0xff] %v294
    // Predicated region
    $region34: #{tpu_custom_call.1} parent=1 // pred_check
      _
    $region35: #{tpu_custom_call.1} parent=1 // pred_check_branch
      %298 = sbr.rel (0) target = $region37
    $region36: #{tpu_custom_call.1} parent=1 // pred_region
      %s300 = ssub.s32 256, 128
      %301 = vsyncadd [#allocation4], %s300
      %s302 = sshll.u32 [#allocation8], 4
      %s303 = int_to_ptr.vmem [resolvable:$true] %s302
      %308 = dma.vmem_to_hbm [thread:$0]  %s303, 128, %s5, [#allocation4], 128, 128, 8
    $region37: #{tpu_custom_call.1} parent=1 // pred_fallthru
      _
    // Predicated region
    $region38: #{tpu_custom_call.1} parent=1 // pred_check
      _
    $region39: #{tpu_custom_call.1} parent=1 // pred_check_branch
      %310 = sbr.rel (0) target = $region41
    $region40: #{tpu_custom_call.1} parent=1 // pred_region
      %311 = dma.done [#allocation4], 256
    $region41: #{tpu_custom_call.1} parent=1 // pred_fallthru
      _
    %312 = vsyncpa [#allocation3], 1
    %313 = vsyncpa [#allocation6], 1
    %314 = vsyncpa [#allocation4], 1

// kernel: tpu_custom_call.1
$region0: #{tpu_custom_call.1}
  #allocation0 [shape = 'u32[]', space=smem, size = 0x4, offset = 0x4, fixed_abs, tag = 'smem constant byte address 0x4 - core index']
  #allocation1 [shape = 'u32[144,128]{1,0:T(1,128)}', space=vmem, size = 0x12000, scoped, tag = 'internal scratch']
  %s0 = inlined_call_operand.hbm [shape: f32[8,128], index: 0, kind: input, shape index: {}]
  %s1 = inlined_call_operand.hbm [shape: bf16[128,128], index: 1, kind: input, shape index: {}]
  %s2 = inlined_call_operand.vmem [shape: f32[1,128], index: 2, kind: input, shape index: {}]
  %s3 = inlined_call_operand.hbm [shape: bf16[128,128], index: 3, kind: input, shape index: {}]
  %s4 = inlined_call_operand.vmem [shape: f32[1,128], index: 4, kind: input, shape index: {}]
  %s5 = inlined_call_operand.hbm [shape: f32[8,128], index: 5, kind: output, shape index: {}]
  %s6 = sld [smem:[#allocation0]]
  $region42: #{tpu_custom_call.1} parent=0
    _
  %s8 = ssub.s32 1, %s6
  %s9 = scalar_select 0, %s8, %s6
  $region1: #{tpu_custom_call.1} parent=0
    #allocation2 [shape = 'u8[8192]{0}', space=vmem, size = 0x2000, scoped, tag = 'input window, operand 0, single buffered']
    #allocation3 [shape = 's32[1]{0}', space=sflag, size = 0x4, scoped, tag = 'scoped memory for tpu_custom_call.1']
    #allocation4 [shape = 's32[1]{0}', space=sflag, size = 0x4, scoped, tag = 'scoped memory for tpu_custom_call.1']
    #allocation5 [shape = 'u8[32768]{0}', space=vmem, size = 0x8000, scoped, tag = 'input window, operand 1, single buffered']
    #allocation6 [shape = 's32[1]{0}', space=sflag, size = 0x4, scoped, tag = 'scoped memory for tpu_custom_call.1']
    #allocation7 [shape = 'u8[32768]{0}', space=vmem, size = 0x8000, scoped, tag = 'input window, operand 3, single buffered']
    #allocation8 [shape = 'u8[8192]{0}', space=vmem, size = 0x2000, scoped, tag = 'output window, operand 0, single buffered']
    %10 = vsyncpa [#allocation3], 0
    %11 = vsyncpa [#allocation6], 0
    %12 = vsyncpa [#allocation4], 0
    // Predicated region
    $region2: #{tpu_custom_call.1} parent=1 // pred_check
      _
    $region3: #{tpu_custom_call.1} parent=1 // pred_check_branch
      %14 = sbr.rel (0) target = $region5
    $region4: #{tpu_custom_call.1} parent=1 // pred_region
      %s16 = ssub.s32 256, 128
      %17 = vsyncadd [#allocation3], %s16
      %s18 = sshll.u32 [#allocation2], 4
      %s19 = int_to_ptr.vmem [resolvable:$true] %s18
      %24 = dma.hbm_to_vmem [thread:$0]  %s0, 128, %s19, [#allocation3], 128, 128, 8
    $region5: #{tpu_custom_call.1} parent=1 // pred_fallthru
      _
    // Predicated region
    $region6: #{tpu_custom_call.1} parent=1 // pred_check
      _
    $region7: #{tpu_custom_call.1} parent=1 // pred_check_branch
      %26 = sbr.rel (0) target = $region9
    $region8: #{tpu_custom_call.1} parent=1 // pred_region
      %s28 = ssub.s32 1024, 1024
      %29 = vsyncadd [#allocation6], %s28
      %s30 = sshll.u32 [#allocation5], 4
      %s31 = int_to_ptr.vmem [resolvable:$true] %s30
      %36 = dma.hbm_to_vmem [thread:$0]  %s1, 1024, %s31, [#allocation6], 64, 64, 4
    $region9: #{tpu_custom_call.1} parent=1 // pred_fallthru
      _
    // Predicated region
    $region10: #{tpu_custom_call.1} parent=1 // pred_check
      _
    $region11: #{tpu_custom_call.1} parent=1 // pred_check_branch
      %38 = sbr.rel (0) target = $region13
    $region12: #{tpu_custom_call.1} parent=1 // pred_region
      _
    $region13: #{tpu_custom_call.1} parent=1 // pred_fallthru
      _
    // Predicated region
    $region14: #{tpu_custom_call.1} parent=1 // pred_check
      _
    $region15: #{tpu_custom_call.1} parent=1 // pred_check_branch
      %40 = sbr.rel (0) target = $region17
    $region16: #{tpu_custom_call.1} parent=1 // pred_region
      %s42 = ssub.s32 1024, 1024
      %43 = vsyncadd [#allocation6], %s42
      %s44 = sshll.u32 [#allocation7], 4
      %s45 = int_to_ptr.vmem [resolvable:$true] %s44
      %50 = dma.hbm_to_vmem [thread:$0]  %s3, 1024, %s45, [#allocation6], 64, 64, 4
    $region17: #{tpu_custom_call.1} parent=1 // pred_fallthru
      _
    // Predicated region
    $region18: #{tpu_custom_call.1} parent=1 // pred_check
      _
    $region19: #{tpu_custom_call.1} parent=1 // pred_check_branch
      %52 = sbr.rel (0) target = $region21
    $region20: #{tpu_custom_call.1} parent=1 // pred_region
      _
    $region21: #{tpu_custom_call.1} parent=1 // pred_fallthru
      _
    // Predicated region
    $region22: #{tpu_custom_call.1} parent=1 // pred_check
      _
    $region23: #{tpu_custom_call.1} parent=1 // pred_check_branch
      %54 = sbr.rel (0) target = $region25
    $region24: #{tpu_custom_call.1} parent=1 // pred_region
      %55 = dma.done [#allocation3], 256
    $region25: #{tpu_custom_call.1} parent=1 // pred_fallthru
      _
    // Predicated region
    $region26: #{tpu_custom_call.1} parent=1 // pred_check
      _
    $region27: #{tpu_custom_call.1} parent=1 // pred_check_branch
      %57 = sbr.rel (0) target = $region29
    $region28: #{tpu_custom_call.1} parent=1 // pred_region
      %58 = dma.done [#allocation6], 1024
    $region29: #{tpu_custom_call.1} parent=1 // pred_fallthru
      _
    // Predicated region
    $region30: #{tpu_custom_call.1} parent=1 // pred_check
      _
    $region31: #{tpu_custom_call.1} parent=1 // pred_check_branch
      %60 = sbr.rel (0) target = $region33
    $region32: #{tpu_custom_call.1} parent=1 // pred_region
      %61 = dma.done [#allocation6], 1024
    $region33: #{tpu_custom_call.1} parent=1 // pred_fallthru
      _
    %v63 = vld [vmem:[#allocation2] sm:$0xff]
    %v64 = vld [vmem:[#allocation2 + $0x8] sm:$0xff]
    %v65 = vpack.c.bf16 %v64, %v63
    %v66 = vld [vmem:[#allocation5] sm:$0xf]
    %v67 = vld [vmem:[#allocation5 + $0x4] sm:$0xf]
    %v68 = vld [vmem:[#allocation5 + $0x8] sm:$0xf]
    %v69 = vld [vmem:[#allocation5 + $0xc] sm:$0xf]
    %v70 = vld [vmem:[#allocation5 + $0x10] sm:$0xf]
    %v71 = vld [vmem:[#allocation5 + $0x14] sm:$0xf]
    %v72 = vld [vmem:[#allocation5 + $0x18] sm:$0xf]
    %v73 = vld [vmem:[#allocation5 + $0x1c] sm:$0xf]
    %v74 = vld [vmem:[#allocation5 + $0x20] sm:$0xf]
    %v75 = vld [vmem:[#allocation5 + $0x24] sm:$0xf]
    %v76 = vld [vmem:[#allocation5 + $0x28] sm:$0xf]
    %v77 = vld [vmem:[#allocation5 + $0x2c] sm:$0xf]
    %v78 = vld [vmem:[#allocation5 + $0x30] sm:$0xf]
    %v79 = vld [vmem:[#allocation5 + $0x34] sm:$0xf]
    %v80 = vld [vmem:[#allocation5 + $0x38] sm:$0xf]
    %v81 = vld [vmem:[#allocation5 + $0x3c] sm:$0xf]
    %v82 = vld [vmem:[%s2] sm:$0x1]
    %v84 = vlaneseq
    %v85 = vshrl.u32 %v84, 7
    %v86 = vsub.s32 0, %v85
    %v87 = vrot.slane %v82, %v86
    %v105 = vunpack.c.l.b16 %v66
    %v106 = vunpack.c.l.b16 %v67
    %v107 = vunpack.c.l.b16 %v68
    %v108 = vunpack.c.l.b16 %v69
    %v109 = vunpack.c.l.b16 %v70
    %v110 = vunpack.c.l.b16 %v71
    %v111 = vunpack.c.l.b16 %v72
    %v112 = vunpack.c.l.b16 %v73
    %v113 = vunpack.c.l.b16 %v74
    %v114 = vunpack.c.l.b16 %v75
    %v115 = vunpack.c.l.b16 %v76
    %v116 = vunpack.c.l.b16 %v77
    %v117 = vunpack.c.l.b16 %v78
    %v118 = vunpack.c.l.b16 %v79
    %v119 = vunpack.c.l.b16 %v80
    %v120 = vunpack.c.l.b16 %v81
    %v121 = vpack.c.b16 %v106, %v105
    %v122 = vpack.c.b16 %v108, %v107
    %v123 = vpack.c.b16 %v110, %v109
    %v124 = vpack.c.b16 %v112, %v111
    %v125 = vpack.c.b16 %v114, %v113
    %v126 = vpack.c.b16 %v116, %v115
    %v127 = vpack.c.b16 %v118, %v117
    %v128 = vpack.c.b16 %v120, %v119
    %137 = vmatprep.subr.bf16.mxu0 0
    %138 = vmatpush1.bf16.msra.mxu0 %v128
    %139 = vmatprep.subr.bf16.mxu0 0
    %140 = vmatpush1.bf16.msra.mxu0 %v127
    %141 = vmatprep.subr.bf16.mxu0 0
    %142 = vmatpush1.bf16.msra.mxu0 %v126
    %143 = vmatprep.subr.bf16.mxu0 0
    %144 = vmatpush1.bf16.msra.mxu0 %v125
    %145 = vmatprep.subr.bf16.mxu0 0
    %146 = vmatpush1.bf16.msra.mxu0 %v124
    %147 = vmatprep.subr.bf16.mxu0 0
    %148 = vmatpush1.bf16.msra.mxu0 %v123
    %149 = vmatprep.subr.bf16.mxu0 0
    %150 = vmatpush1.bf16.msra.mxu0 %v122
    %151 = vmatprep.subr.bf16.mxu0 0
    %152 = vmatpush1.bf16.msra.mxu0 %v121
    %153 = vmatprep.subr.bf16.mxu0 0
    %154 = vmatpush2.bf16.msra.mxu0 0
    %155 = vmatprep.subr.bf16.mxu0 0
    %156 = vmatpush2.bf16.msra.mxu0 0
    %157 = vmatprep.subr.bf16.mxu0 0
    %158 = vmatpush2.bf16.msra.mxu0 0
    %159 = vmatprep.subr.bf16.mxu0 0
    %160 = vmatpush2.bf16.msra.mxu0 0
    %161 = vmatprep.subr.bf16.mxu0 0
    %162 = vmatpush2.bf16.msra.mxu0 0
    %163 = vmatprep.subr.bf16.mxu0 0
    %164 = vmatpush2.bf16.msra.mxu0 0
    %165 = vmatprep.subr.bf16.mxu0 0
    %166 = vmatpush2.bf16.msra.mxu0 0
    %167 = vmatprep.subr.bf16.mxu0 0
    %168 = vmatpush2.bf16.msra.mxu0 0
    %169 = vmatprep.mubr.bf16.mxu0 0
    %170 = vmatmul.mubr.bf16.gmra.mxu0 %v65
    %v171 = vpop.f32.mrf.mxu0
    %v172 = vadd.f32 %v87, %v171
    %v173 = vpop.f32.mrf.mxu0
    %v174 = vpop.f32.mrf.mxu0
    %v175 = vadd.f32 %v87, %v174
    %v176 = vpop.f32.mrf.mxu0
    %177 = vdwg.mxu0
    %v178 = vmax.f32 %v172, 0.0
    %v179 = vmax.f32 %v175, 0.0
    %v180 = vpack.c.bf16 %v179, %v178
    %v181 = vld [vmem:[#allocation7] sm:$0xf]
    %v182 = vld [vmem:[#allocation7 + $0x4] sm:$0xf]
    %v183 = vld [vmem:[#allocation7 + $0x8] sm:$0xf]
    %v184 = vld [vmem:[#allocation7 + $0xc] sm:$0xf]
    %v185 = vld [vmem:[#allocation7 + $0x10] sm:$0xf]
    %v186 = vld [vmem:[#allocation7 + $0x14] sm:$0xf]
    %v187 = vld [vmem:[#allocation7 + $0x18] sm:$0xf]
    %v188 = vld [vmem:[#allocation7 + $0x1c] sm:$0xf]
    %v189 = vld [vmem:[#allocation7 + $0x20] sm:$0xf]
    %v190 = vld [vmem:[#allocation7 + $0x24] sm:$0xf]
    %v191 = vld [vmem:[#allocation7 + $0x28] sm:$0xf]
    %v192 = vld [vmem:[#allocation7 + $0x2c] sm:$0xf]
    %v193 = vld [vmem:[#allocation7 + $0x30] sm:$0xf]
    %v194 = vld [vmem:[#allocation7 + $0x34] sm:$0xf]
    %v195 = vld [vmem:[#allocation7 + $0x38] sm:$0xf]
    %v196 = vld [vmem:[#allocation7 + $0x3c] sm:$0xf]
    %v197 = vld [vmem:[%s4] sm:$0x1]
    %v199 = vlaneseq
    %v200 = vshrl.u32 %v199, 7
    %v201 = vsub.s32 0, %v200
    %v202 = vrot.slane %v197, %v201
    %v220 = vunpack.c.l.b16 %v181
    %v221 = vunpack.c.l.b16 %v182
    %v222 = vunpack.c.l.b16 %v183
    %v223 = vunpack.c.l.b16 %v184
    %v224 = vunpack.c.l.b16 %v185
    %v225 = vunpack.c.l.b16 %v186
    %v226 = vunpack.c.l.b16 %v187
    %v227 = vunpack.c.l.b16 %v188
    %v228 = vunpack.c.l.b16 %v189
    %v229 = vunpack.c.l.b16 %v190
    %v230 = vunpack.c.l.b16 %v191
    %v231 = vunpack.c.l.b16 %v192
    %v232 = vunpack.c.l.b16 %v193
    %v233 = vunpack.c.l.b16 %v194
    %v234 = vunpack.c.l.b16 %v195
    %v235 = vunpack.c.l.b16 %v196
    %v236 = vpack.c.b16 %v221, %v220
    %v237 = vpack.c.b16 %v223, %v222
    %v238 = vpack.c.b16 %v225, %v224
    %v239 = vpack.c.b16 %v227, %v226
    %v240 = vpack.c.b16 %v229, %v228
    %v241 = vpack.c.b16 %v231, %v230
    %v242 = vpack.c.b16 %v233, %v232
    %v243 = vpack.c.b16 %v235, %v234
    %252 = vmatprep.subr.bf16.mxu0 0
    %253 = vmatpush1.bf16.msra.mxu0 %v243
    %254 = vmatprep.subr.bf16.mxu0 0
    %255 = vmatpush1.bf16.msra.mxu0 %v242
    %256 = vmatprep.subr.bf16.mxu0 0
    %257 = vmatpush1.bf16.msra.mxu0 %v241
    %258 = vmatprep.subr.bf16.mxu0 0
    %259 = vmatpush1.bf16.msra.mxu0 %v240
    %260 = vmatprep.subr.bf16.mxu0 0
    %261 = vmatpush1.bf16.msra.mxu0 %v239
    %262 = vmatprep.subr.bf16.mxu0 0
    %263 = vmatpush1.bf16.msra.mxu0 %v238
    %264 = vmatprep.subr.bf16.mxu0 0
    %265 = vmatpush1.bf16.msra.mxu0 %v237
    %266 = vmatprep.subr.bf16.mxu0 0
    %267 = vmatpush1.bf16.msra.mxu0 %v236
    %268 = vmatprep.subr.bf16.mxu0 0
    %269 = vmatpush2.bf16.msra.mxu0 0
    %270 = vmatprep.subr.bf16.mxu0 0
    %271 = vmatpush2.bf16.msra.mxu0 0
    %272 = vmatprep.subr.bf16.mxu0 0
    %273 = vmatpush2.bf16.msra.mxu0 0
    %274 = vmatprep.subr.bf16.mxu0 0
    %275 = vmatpush2.bf16.msra.mxu0 0
    %276 = vmatprep.subr.bf16.mxu0 0
    %277 = vmatpush2.bf16.msra.mxu0 0
    %278 = vmatprep.subr.bf16.mxu0 0
    %279 = vmatpush2.bf16.msra.mxu0 0
    %280 = vmatprep.subr.bf16.mxu0 0
    %281 = vmatpush2.bf16.msra.mxu0 0
    %282 = vmatprep.subr.bf16.mxu0 0
    %283 = vmatpush2.bf16.msra.mxu0 0
    %284 = vmatprep.mubr.bf16.mxu0 0
    %285 = vmatmul.mubr.bf16.gmra.mxu0 %v180
    %v286 = vpop.f32.mrf.mxu0
    %v287 = vadd.f32 %v202, %v286
    %v288 = vpop.f32.mrf.mxu0
    %v289 = vpop.f32.mrf.mxu0
    %v290 = vadd.f32 %v202, %v289
    %v291 = vpop.f32.mrf.mxu0
    %292 = vdwg.mxu0
    %v293 = vtanh.pop %v287
    %v294 = vtanh.pop %v290
    %295 = vst [vmem:[#allocation8] sm:$0xff] %v293
    %296 = vst [vmem:[#allocation8 + $0x8] sm:$0xff] %v294
    // Predicated region
    $region34: #{tpu_custom_call.1} parent=1 // pred_check
      _
    $region35: #{tpu_custom_call.1} parent=1 // pred_check_branch
      %298 = sbr.rel (0) target = $region37
    $region36: #{tpu_custom_call.1} parent=1 // pred_region
      %s300 = ssub.s32 256, 128
      %301 = vsyncadd [#allocation4], %s300
      %s302 = sshll.u32 [#allocation8], 4
      %s303 = int_to_ptr.vmem [resolvable:$true] %s302
      %308 = dma.vmem_to_hbm [thread:$0]  %s303, 128, %s5, [#allocation4], 128, 128, 8
    $region37: #{tpu_custom_call.1} parent=1 // pred_fallthru
      _
    // Predicated region
    $region38: #{tpu_custom_call.1} parent=1 // pred_check
      _
    $region39: #{tpu_custom_call.1} parent=1 // pred_check_branch
      %310 = sbr.rel (0) target = $region41
    $region40: #{tpu_custom_call.1} parent=1 // pred_region
      %311 = dma.done [#allocation4], 256
    $region41: #{tpu_custom_call.1} parent=1 // pred_fallthru
      _
    %312 = vsyncpa [#allocation3], 1
    %313 = vsyncpa [#allocation6], 1
    %314 = vsyncpa [#allocation4], 1

</llo_original>
